<compile_context>
chip_gen: v5e
topology: v5e:2x2
jax: 0.10.0
libtpu: 0.0.40
codegen_flags: <defaults>
</compile_context>

<pallas_src>
import functools

import jax
import jax.numpy as jnp
from jax import lax
from jax.experimental import pallas as pl
from jax.experimental.pallas import tpu as pltpu


def _fused_ce_kernel(nvalid_ref, row_ref, col_ref, out_ref,
                     row_m, row_l, col_m, col_l, *, needs_mask):
    """One grid step of the fused bidirectional CLIP cross-entropy.

    grid = (row tile i, column tile j); j is the inner (row-LSE reduction) axis.
      row_ref : (tile, D) sqrt(scale)-scaled image features for row tile i
      col_ref : (tile, D) sqrt(scale)-scaled text  features for col tile j
    The (tile, tile) logits block s = rows @ cols^T equals
    scale * I_i @ T_j^T, and its transpose is the text->image logits block, so
    one MXU pass serves both cross-entropy directions.
    Outputs (SMEM, (3, n_tiles)):
      out[0, i] = sum over valid rows in tile i of row-wise logsumexp
      out[1, j] = sum over valid cols in tile j of column-wise logsumexp
      out[2, i] = sum over valid diagonal (target) logits in tile i
    """
    i = pl.program_id(0)
    j = pl.program_id(1)
    n_row = pl.num_programs(0)
    n_col = pl.num_programs(1)
    tile = row_ref.shape[0]
    neg = jnp.float32(-1e30)

    row_op = row_ref[...]                       # bf16 (default) or f32 operand
    col_op = col_ref[...]

    # logits tile, contracting dim 1 of both operands (no materialized
    # transpose / relayout of the column tile); f32 MXU accumulation.
    s = lax.dot_general(
        row_op, col_op,
        dimension_numbers=(((1,), (1,)), ((), ())),
        preferred_element_type=jnp.float32)

    if needs_mask:
        row_ids = i * tile + lax.broadcasted_iota(jnp.int32, (tile, 1), 0)
        col_ids = j * tile + lax.broadcasted_iota(jnp.int32, (1, tile), 1)
        row_valid = row_ids < nvalid_ref[0]
        col_valid = col_ids < nvalid_ref[0]
        s = jnp.where(row_valid & col_valid, s, neg)

    # ---- image->text direction: row-wise online LSE (reset per row tile) ----
    @pl.when(j == 0)
    def _init_rows():
        row_m[...] = jnp.full_like(row_m, neg)
        row_l[...] = jnp.zeros_like(row_l)

    m_prev = row_m[...]
    m_new = jnp.maximum(m_prev, jnp.max(s, axis=1, keepdims=True))
    row_l[...] = (jnp.exp(m_prev - m_new) * row_l[...]
                  + jnp.sum(jnp.exp(s - m_new), axis=1, keepdims=True))
    row_m[...] = m_new

    # ---- text->image direction: column-wise online LSE (persists across i) --
    @pl.when(i == 0)
    def _init_cols():
        col_m[j] = jnp.full((1, tile), neg, jnp.float32)
        col_l[j] = jnp.zeros((1, tile), jnp.float32)

    cm_prev = col_m[j]
    cm_new = jnp.maximum(cm_prev, jnp.max(s, axis=0, keepdims=True))
    col_l[j] = (jnp.exp(cm_prev - cm_new) * col_l[j]
                + jnp.sum(jnp.exp(s - cm_new), axis=0, keepdims=True))
    col_m[j] = cm_new

    # ---- diagonal (target) logits: O(tile*D) on the VPU, no (B,B) mask pass --
    @pl.when(j == i)
    def _diag():
        d = jnp.sum(row_op.astype(jnp.float32) * col_op.astype(jnp.float32),
                    axis=1, keepdims=True)                       # (tile, 1)
        if needs_mask:
            rid = i * tile + lax.broadcasted_iota(jnp.int32, (tile, 1), 0)
            d = jnp.where(rid < nvalid_ref[0], d, 0.0)
        out_ref[2, i] = jnp.sum(d)

    # ---- finalize the row-direction partial sum for row tile i --------------
    @pl.when(j == n_col - 1)
    def _finalize_rows():
        lse = row_m[...] + jnp.log(row_l[...])
        if needs_mask:
            rid = i * tile + lax.broadcasted_iota(jnp.int32, (tile, 1), 0)
            lse = jnp.where(rid < nvalid_ref[0], lse, 0.0)
        out_ref[0, i] = jnp.sum(lse)

    # ---- finalize the column-direction partial sum for column tile j --------
    @pl.when(i == n_row - 1)
    def _finalize_cols():
        clse = col_m[j] + jnp.log(col_l[j])
        if needs_mask:
            cid = j * tile + lax.broadcasted_iota(jnp.int32, (1, tile), 1)
            clse = jnp.where(cid < nvalid_ref[0], clse, 0.0)
        out_ref[1, j] = jnp.sum(clse)


def _pick_tile(batch, feat_dim, itemsize):
    """Square logits-tile size: biggest that comfortably fits scoped VMEM.

    Note (small-D regime): for D <= ~256 the per-step matmul no longer
    dominates — the binding units are the EUP (2*tile^2 exps/step) and XLU
    (two cross-lane reductions/step).  Larger tiles still help there (fewer
    ~0.35 us grid steps); MXU/DMA-side tweaks do not.
    """
    if batch < 128:
        return -(-batch // 8) * 8            # one (sublane-padded) tile
    try:
        vmem_cap = pltpu.get_tpu_info().vmem_capacity_bytes
    except Exception:                        # interpret / AOT contexts
        vmem_cap = 64 * 1024 * 1024          # v7x physical VMEM (worst case)
    budget = vmem_cap // 2                   # leave headroom for the compiler
    for t in (1024, 512, 256, 128):
        if t > batch:
            continue
        if t == 1024 and (itemsize > 2 or batch % 1024 != 0
                          or vmem_cap < 100 * 1024 * 1024):
            # tile=1024 only with bf16 streaming on 128-MiB-VMEM parts
            # (v5e/v6e); on v7x (64 MiB) tile=512 bf16 already clears the
            # HBM roofline.
            continue
        working = 4 * t * feat_dim * itemsize + 6 * t * t * 4
        if working <= budget:
            return t
    return 128


def clip_contrastive_loss(image_features, text_features, logit_scale,
                          *, use_bf16_matmul=True, tile=None):
    """Pallas-fused CLIP contrastive loss (world_size == 1)."""
    B, D = image_features.shape
    assert text_features.shape == (B, D)

    # TODO(synk): bf16 operands with logit_scale ~ 100 give ~0.3-0.5 absolute
    # logit rounding error; validate loss/grad quality vs use_bf16_matmul=False
    # before relying on it for training.
    compute_dtype = jnp.bfloat16 if use_bf16_matmul else jnp.float32
    itemsize = jnp.dtype(compute_dtype).itemsize
    if tile is None:
        tile = _pick_tile(B, D, itemsize)
    b_pad = -(-B // tile) * tile
    n_tiles = b_pad // tile
    needs_mask = (b_pad != B)

    # Fold sqrt(logit_scale) into BOTH operands (fused with the bf16 cast and
    # padding): the kernel's single MXU pass then yields scale * I @ T^T
    # directly, with no in-kernel scale pass or row-operand scratch.
    root = jnp.sqrt(jnp.asarray(logit_scale, jnp.float32))

    def _prep(x):
        x = (x.astype(jnp.float32) * root).astype(compute_dtype)
        if needs_mask:
            x = jnp.pad(x, ((0, b_pad - B), (0, 0)))
        return x

    rows = _prep(image_features)      # (b_pad, D)  image side (row operand)
    cols = _prep(text_features)       # (b_pad, D)  text side (column stream)
    n_valid = jnp.full((1,), B, jnp.int32)

    kernel = functools.partial(_fused_ce_kernel, needs_mask=needs_mask)

    # Explicit VMEM budget: double-buffered row + column tiles, (tile,tile)
    # f32 logits/exp intermediates, and the LSE scratch (lane/sublane padded).
    est = (4 * tile * D * itemsize
           + 6 * tile * tile * 4
           + 2 * tile * 128 * 4
           + 2 * n_tiles * 8 * tile * 4)
    vmem_limit = int(min(max(32 * 1024 * 1024, est * 5 // 4),
                         96 * 1024 * 1024))

    partials = pl.pallas_call(
        kernel,
        out_shape=jax.ShapeDtypeStruct((3, n_tiles), jnp.float32),
        grid_spec=pltpu.PrefetchScalarGridSpec(
            num_scalar_prefetch=1,                   # n_valid -> SMEM
            grid=(n_tiles, n_tiles),
            in_specs=[
                # Row operand: row tile i, resident across the inner j axis.
                pl.BlockSpec((tile, D), lambda i, j, nv: (i, 0)),
                # Column operand: column tile j, streamed along the inner
                # reduction axis (default double-buffered pipeline overlaps
                # its DMA with the matmul / online-softmax updates).
                pl.BlockSpec((tile, D), lambda i, j, nv: (j, 0)),
            ],
            out_specs=pl.BlockSpec(memory_space=pltpu.SMEM),
            scratch_shapes=[
                pltpu.VMEM((tile, 1), jnp.float32),          # row running max
                pltpu.VMEM((tile, 1), jnp.float32),          # row running sum
                pltpu.VMEM((n_tiles, 1, tile), jnp.float32),  # col running max
                pltpu.VMEM((n_tiles, 1, tile), jnp.float32),  # col running sum
            ],
        ),
        compiler_params=pltpu.CompilerParams(
            # Both axes carry state (row LSE across j, column LSE across i),
            # so they must stay "arbitrary" on a single TensorCore.
            dimension_semantics=("arbitrary", "arbitrary"),
            vmem_limit_bytes=vmem_limit,
        ),
    )(n_valid, rows, cols)

    row_sum = jnp.sum(partials[0])     # sum_r logsumexp(logits[r, :])
    col_sum = jnp.sum(partials[1])     # sum_c logsumexp(logits[:, c])
    diag_sum = jnp.sum(partials[2])    # sum_r logits[r, r]
    # 0.5 * ( mean CE(logits, arange) + mean CE(logits^T, arange) )
    return 0.5 * (row_sum + col_sum - 2.0 * diag_sum) / B


def zs_loss_forward(image_features, text_features, logit_scale,
                    cls_embeds_txt, cls_embeds_visual, logit_scale_local,
                    classification_weights_ema, concepts_labels,
                    output_dict=False, use_bf16_matmul=True):
    """ZSLoss.forward, world_size=1, use_dense_loss=False (module defaults)."""
    # gather_features is identity for world_size == 1.
    cliploss = clip_contrastive_loss(image_features, text_features, logit_scale,
                                     use_bf16_matmul=use_bf16_matmul)

    zero = jnp.float32(0.0)
    dense_loss = zero          # use_dense_loss=False path
    acc = zero
    n_non_zero_classes = zero
    all_n_non_zero_classes = zero
    s_min = zero
    s_max = zero

    total = cliploss + dense_loss
    if output_dict:
        return ({"cliploss": cliploss, "ccloss": dense_loss},
                classification_weights_ema, acc, n_non_zero_classes,
                all_n_non_zero_classes, s_min, s_max)
    return (total, classification_weights_ema, acc, n_non_zero_classes,
            all_n_non_zero_classes, s_min, s_max)


# ------------------------- pure-JAX references ------------------------------

def _ce_mean(logits):
    return jnp.mean(jax.nn.logsumexp(logits, axis=1) - jnp.diagonal(logits))


def _reference_clip_loss(img, txt, scale):
    """Module-faithful reference (f32, exact matmul precision)."""
    logits_i = scale * jnp.dot(img, txt.T, precision=lax.Precision.HIGHEST)
    logits_t = scale * jnp.dot(txt, img.T, precision=lax.Precision.HIGHEST)
    return 0.5 * (_ce_mean(logits_i) + _ce_mean(logits_t))


def _reference_clip_loss_bf16(img, txt, scale):
    """Reference mimicking the kernel's bf16 operand rounding."""
    root = jnp.sqrt(jnp.float32(scale))
    a = (img * root).astype(jnp.bfloat16).astype(jnp.float32)
    b = (txt * root).astype(jnp.bfloat16).astype(jnp.float32)
    logits = jnp.dot(a, b.T, precision=lax.Precision.HIGHEST)
    return 0.5 * (_ce_mean(logits) + _ce_mean(logits.T))


if __name__ == "__main__":
    key = jax.random.PRNGKey(0)
    k1, k2, k3, k4, k5, k6, k7 = jax.random.split(key, 7)

    B, D = 8, 32            # batch of paired image/text features, embed dim 32
    n_classes = 16          # args.n_classes (deterministic synthetic init)

    def l2norm(x):
        return x / jnp.linalg.norm(x, axis=-1, keepdims=True)

    image_features = l2norm(jax.random.normal(k1, (B, D), jnp.float32))
    text_features = l2norm(jax.random.normal(k2, (B, D), jnp.float32))
    cls_embeds_txt = l2norm(jax.random.normal(k3, (B, D), jnp.float32))
    cls_embeds_visual = l2norm(jax.random.normal(k4, (B, D), jnp.float32))
    classification_weights_ema = l2norm(
        jax.random.normal(k5, (n_classes, D), jnp.float32))
    concepts_labels = jnp.zeros((B,), jnp.int32)
    logit_scale = jnp.float32(100.0)
    logit_scale_local = jnp.float32(50.0)

    # 1) f32 MXU path: tight check against the exact module reference.
    out = zs_loss_forward(
        image_features, text_features, logit_scale,
        cls_embeds_txt, cls_embeds_visual, logit_scale_local,
        classification_weights_ema, concepts_labels,
        use_bf16_matmul=False,
    )
    total_loss = jax.block_until_ready(out[0])
    ref = _reference_clip_loss(image_features, text_features, logit_scale)
    assert jnp.allclose(total_loss, ref, rtol=1e-4, atol=1e-3), (total_loss, ref)

    # 2) Default bf16 MXU path: tight check vs the bf16-operand reference and a
    #    loose sanity check vs the exact f32 reference.
    loss_bf16 = jax.block_until_ready(
        clip_contrastive_loss(image_features, text_features, logit_scale))
    ref_bf16 = _reference_clip_loss_bf16(image_features, text_features,
                                         logit_scale)
    assert jnp.allclose(loss_bf16, ref_bf16, rtol=1e-3, atol=1e-2), \
        (loss_bf16, ref_bf16)
    assert jnp.allclose(loss_bf16, ref, rtol=5e-2, atol=1.0), (loss_bf16, ref)

    # 3) Ragged batch + multi-tile grid: exercises pad/mask, the persistent
    #    column LSE across row tiles, and the diagonal blocks.
    Br = 12
    img_r = l2norm(jax.random.normal(k6, (Br, D), jnp.float32))
    txt_r = l2norm(jax.random.normal(k7, (Br, D), jnp.float32))
    loss_r = jax.block_until_ready(
        clip_contrastive_loss(img_r, txt_r, logit_scale,
                              use_bf16_matmul=False, tile=8))
    ref_r = _reference_clip_loss(img_r, txt_r, logit_scale)
    assert jnp.allclose(loss_r, ref_r, rtol=1e-4, atol=1e-3), (loss_r, ref_r)

    print("KERNEL_OK")
</pallas_src>

<mosaic_0001>
module attributes {stable_mosaic.version = 11 : i64} {
  func.func @_fused_ce_kernel(%arg0: i32, %arg1: i32, %arg2: memref<1xi32, #tpu.memory_space<smem>>, %arg3: memref<8x32xf32, #tpu.memory_space<vmem>>, %arg4: memref<8x32xf32, #tpu.memory_space<vmem>>, %arg5: memref<3x1xf32, #tpu.memory_space<smem>>, %arg6: memref<8x1xf32, #tpu.memory_space<vmem>>, %arg7: memref<8x1xf32, #tpu.memory_space<vmem>>, %arg8: memref<1x1x8xf32, #tpu.memory_space<vmem>>, %arg9: memref<1x1x8xf32, #tpu.memory_space<vmem>>) attributes {dimension_semantics = [#tpu.dimension_semantics<arbitrary>, #tpu.dimension_semantics<arbitrary>], iteration_bounds = array<i64: 1, 1>, scalar_prefetch = 1 : i64, scratch_operands = 4 : i64, tpu.core_type = #tpu.core_type<tc>, window_params = [{transform_indices = @transform_0, window_bounds = array<i64: 8, 32>}, {transform_indices = @transform_1, window_bounds = array<i64: 8, 32>}, {transform_indices = @transform_2, window_bounds = array<i64: 3, 1>}]} {
    %c0 = arith.constant 0 : index
    %c0_0 = arith.constant 0 : index
    %0 = vector.load %arg3[%c0, %c0_0] : memref<8x32xf32, #tpu.memory_space<vmem>>, vector<8x32xf32>
    %c0_1 = arith.constant 0 : index
    %c0_2 = arith.constant 0 : index
    %1 = vector.load %arg4[%c0_1, %c0_2] : memref<8x32xf32, #tpu.memory_space<vmem>>, vector<8x32xf32>
    %cst = arith.constant dense<0.000000e+00> : vector<8x8xf32>
    %2 = tpu.matmul %0, %1, %cst {dimension_numbers = #tpu.dot_dimension_numbers<[1], [1], [0], [0], [0, 0, 1, 0], [], []>} : vector<8x32xf32>, vector<8x32xf32>, vector<8x8xf32> -> vector<8x8xf32>
    %c0_i32 = arith.constant 0 : i32
    %3 = arith.cmpi eq, %arg1, %c0_i32 : i32
    %4 = arith.extui %3 : i1 to i32
    %cst_3 = arith.constant -1.000000e+30 : f32
    %c0_i32_4 = arith.constant 0 : i32
    %5 = arith.cmpi ne, %4, %c0_i32_4 : i32
    scf.if %5 {
      %60 = vector.broadcast %cst_3 : f32 to vector<8x1xf32>
      %c0_33 = arith.constant 0 : index
      %c0_34 = arith.constant 0 : index
      %61 = vector.load %arg6[%c0_33, %c0_34] : memref<8x1xf32, #tpu.memory_space<vmem>>, vector<8x1xf32>
      tpu.vector_store %arg6[%c0_33, %c0_34], %60 {strides = array<i32>} : memref<8x1xf32, #tpu.memory_space<vmem>>, vector<8x1xf32>,
      %cst_35 = arith.constant 0.000000e+00 : f32
      %62 = vector.broadcast %cst_35 : f32 to vector<8x1xf32>
      %c0_36 = arith.constant 0 : index
      %c0_37 = arith.constant 0 : index
      %63 = vector.load %arg7[%c0_36, %c0_37] : memref<8x1xf32, #tpu.memory_space<vmem>>, vector<8x1xf32>
      tpu.vector_store %arg7[%c0_36, %c0_37], %62 {strides = array<i32>} : memref<8x1xf32, #tpu.memory_space<vmem>>, vector<8x1xf32>,
    } else {
    }
    %c0_5 = arith.constant 0 : index
    %c0_6 = arith.constant 0 : index
    %6 = vector.load %arg6[%c0_5, %c0_6] : memref<8x1xf32, #tpu.memory_space<vmem>>, vector<8x1xf32>
    %cst_7 = arith.constant dense<0xFF800000> : vector<8xf32>
    %7 = vector.multi_reduction <maximumf>, %2, %cst_7 [1] : vector<8x8xf32> to vector<8xf32>
    %8 = vector.shape_cast %7 : vector<8xf32> to vector<8x1xf32>
    %9 = arith.maximumf %6, %8 : vector<8x1xf32>
    %10 = arith.subf %6, %9 : vector<8x1xf32>
    %11 = math.exp %10 : vector<8x1xf32>
    %c0_8 = arith.constant 0 : index
    %c0_9 = arith.constant 0 : index
    %12 = vector.load %arg7[%c0_8, %c0_9] : memref<8x1xf32, #tpu.memory_space<vmem>>, vector<8x1xf32>
    %13 = arith.mulf %11, %12 : vector<8x1xf32>
    %14 = vector.broadcast %9 : vector<8x1xf32> to vector<8x8xf32>
    %15 = arith.subf %2, %14 : vector<8x8xf32>
    %16 = math.exp %15 : vector<8x8xf32>
    %cst_10 = arith.constant dense<0.000000e+00> : vector<8xf32>
    %17 = vector.multi_reduction <add>, %16, %cst_10 [1] : vector<8x8xf32> to vector<8xf32>
    %18 = vector.shape_cast %17 : vector<8xf32> to vector<8x1xf32>
    %19 = arith.addf %13, %18 : vector<8x1xf32>
    %c0_11 = arith.constant 0 : index
    %c0_12 = arith.constant 0 : index
    %20 = vector.load %arg7[%c0_11, %c0_12] : memref<8x1xf32, #tpu.memory_space<vmem>>, vector<8x1xf32>
    tpu.vector_store %arg7[%c0_11, %c0_12], %19 {strides = array<i32>} : memref<8x1xf32, #tpu.memory_space<vmem>>, vector<8x1xf32>,
    %c0_13 = arith.constant 0 : index
    %c0_14 = arith.constant 0 : index
    %21 = vector.load %arg6[%c0_13, %c0_14] : memref<8x1xf32, #tpu.memory_space<vmem>>, vector<8x1xf32>
    tpu.vector_store %arg6[%c0_13, %c0_14], %9 {strides = array<i32>} : memref<8x1xf32, #tpu.memory_space<vmem>>, vector<8x1xf32>,
    %c0_i32_15 = arith.constant 0 : i32
    %22 = arith.cmpi eq, %arg0, %c0_i32_15 : i32
    %23 = arith.extui %22 : i1 to i32
    %cst_16 = arith.constant -1.000000e+30 : f32
    %c0_i32_17 = arith.constant 0 : i32
    %24 = arith.cmpi ne, %23, %c0_i32_17 : i32
    scf.if %24 {
      %60 = vector.broadcast %cst_16 : f32 to vector<1x8xf32>
      %61 = arith.index_cast %arg1 : i32 to index
      %c0_33 = arith.constant 0 : index
      %c0_34 = arith.constant 0 : index
      %62 = vector.load %arg8[%61, %c0_33, %c0_34] : memref<1x1x8xf32, #tpu.memory_space<vmem>>, vector<1x1x8xf32>
      %63 = vector.shape_cast %62 : vector<1x1x8xf32> to vector<1x8xf32>
      %64 = vector.shape_cast %60 : vector<1x8xf32> to vector<1x1x8xf32>
      tpu.vector_store %arg8[%61, %c0_33, %c0_34], %64 {strides = array<i32>} : memref<1x1x8xf32, #tpu.memory_space<vmem>>, vector<1x1x8xf32>,
      %cst_35 = arith.constant 0.000000e+00 : f32
      %65 = vector.broadcast %cst_35 : f32 to vector<1x8xf32>
      %66 = arith.index_cast %arg1 : i32 to index
      %c0_36 = arith.constant 0 : index
      %c0_37 = arith.constant 0 : index
      %67 = vector.load %arg9[%66, %c0_36, %c0_37] : memref<1x1x8xf32, #tpu.memory_space<vmem>>, vector<1x1x8xf32>
      %68 = vector.shape_cast %67 : vector<1x1x8xf32> to vector<1x8xf32>
      %69 = vector.shape_cast %65 : vector<1x8xf32> to vector<1x1x8xf32>
      tpu.vector_store %arg9[%66, %c0_36, %c0_37], %69 {strides = array<i32>} : memref<1x1x8xf32, #tpu.memory_space<vmem>>, vector<1x1x8xf32>,
    } else {
    }
    %25 = arith.index_cast %arg1 : i32 to index
    %c0_18 = arith.constant 0 : index
    %c0_19 = arith.constant 0 : index
    %26 = vector.load %arg8[%25, %c0_18, %c0_19] : memref<1x1x8xf32, #tpu.memory_space<vmem>>, vector<1x1x8xf32>
    %27 = vector.shape_cast %26 : vector<1x1x8xf32> to vector<1x8xf32>
    %cst_20 = arith.constant dense<0xFF800000> : vector<8xf32>
    %28 = vector.multi_reduction <maximumf>, %2, %cst_20 [0] : vector<8x8xf32> to vector<8xf32>
    %29 = vector.shape_cast %28 : vector<8xf32> to vector<1x8xf32>
    %30 = arith.maximumf %27, %29 : vector<1x8xf32>
    %31 = arith.subf %27, %30 : vector<1x8xf32>
    %32 = math.exp %31 : vector<1x8xf32>
    %33 = arith.index_cast %arg1 : i32 to index
    %c0_21 = arith.constant 0 : index
    %c0_22 = arith.constant 0 : index
    %34 = vector.load %arg9[%33, %c0_21, %c0_22] : memref<1x1x8xf32, #tpu.memory_space<vmem>>, vector<1x1x8xf32>
    %35 = vector.shape_cast %34 : vector<1x1x8xf32> to vector<1x8xf32>
    %36 = arith.mulf %32, %35 : vector<1x8xf32>
    %37 = vector.broadcast %30 : vector<1x8xf32> to vector<8x8xf32>
    %38 = arith.subf %2, %37 : vector<8x8xf32>
    %39 = math.exp %38 : vector<8x8xf32>
    %cst_23 = arith.constant dense<0.000000e+00> : vector<8xf32>
    %40 = vector.multi_reduction <add>, %39, %cst_23 [0] : vector<8x8xf32> to vector<8xf32>
    %41 = vector.shape_cast %40 : vector<8xf32> to vector<1x8xf32>
    %42 = arith.addf %36, %41 : vector<1x8xf32>
    %43 = arith.index_cast %arg1 : i32 to index
    %c0_24 = arith.constant 0 : index
    %c0_25 = arith.constant 0 : index
    %44 = vector.load %arg9[%43, %c0_24, %c0_25] : memref<1x1x8xf32, #tpu.memory_space<vmem>>, vector<1x1x8xf32>
    %45 = vector.shape_cast %44 : vector<1x1x8xf32> to vector<1x8xf32>
    %46 = vector.shape_cast %42 : vector<1x8xf32> to vector<1x1x8xf32>
    tpu.vector_store %arg9[%43, %c0_24, %c0_25], %46 {strides = array<i32>} : memref<1x1x8xf32, #tpu.memory_space<vmem>>, vector<1x1x8xf32>,
    %47 = arith.index_cast %arg1 : i32 to index
    %c0_26 = arith.constant 0 : index
    %c0_27 = arith.constant 0 : index
    %48 = vector.load %arg8[%47, %c0_26, %c0_27] : memref<1x1x8xf32, #tpu.memory_space<vmem>>, vector<1x1x8xf32>
    %49 = vector.shape_cast %48 : vector<1x1x8xf32> to vector<1x8xf32>
    %50 = vector.shape_cast %30 : vector<1x8xf32> to vector<1x1x8xf32>
    tpu.vector_store %arg8[%47, %c0_26, %c0_27], %50 {strides = array<i32>} : memref<1x1x8xf32, #tpu.memory_space<vmem>>, vector<1x1x8xf32>,
    %51 = arith.cmpi eq, %arg1, %arg0 : i32
    %52 = arith.extui %51 : i1 to i32
    %c0_i32_28 = arith.constant 0 : i32
    %53 = arith.cmpi ne, %52, %c0_i32_28 : i32
    scf.if %53 {
      %60 = arith.mulf %0, %1 : vector<8x32xf32>
      %cst_33 = arith.constant dense<0.000000e+00> : vector<8xf32>
      %61 = vector.multi_reduction <add>, %60, %cst_33 [1] : vector<8x32xf32> to vector<8xf32>
      %62 = vector.shape_cast %61 : vector<8xf32> to vector<8x1xf32>
      %63 = vector.shape_cast %62 : vector<8x1xf32> to vector<1x8x1xf32>
      %cst_34 = arith.constant dense<0.000000e+00> : vector<1xf32>
      %64 = vector.multi_reduction <add>, %63, %cst_34 [1, 2] : vector<1x8x1xf32> to vector<1xf32>
      %65 = vector.shape_cast %64 : vector<1xf32> to vector<1x1x1xf32>
      %66 = vector.extract %65[0, 0, 0] : f32 from vector<1x1x1xf32>
      %c2 = arith.constant 2 : index
      %67 = arith.index_cast %arg0 : i32 to index
      %68 = memref.load %arg5[%c2, %67] : memref<3x1xf32, #tpu.memory_space<smem>>
      memref.store %66, %arg5[%c2, %67] : memref<3x1xf32, #tpu.memory_space<smem>>
    } else {
    }
    %c0_i32_29 = arith.constant 0 : i32
    %54 = arith.cmpi eq, %arg1, %c0_i32_29 : i32
    %55 = arith.extui %54 : i1 to i32
    %c0_i32_30 = arith.constant 0 : i32
    %56 = arith.cmpi ne, %55, %c0_i32_30 : i32
    scf.if %56 {
      %c0_33 = arith.constant 0 : index
      %c0_34 = arith.constant 0 : index
      %60 = vector.load %arg6[%c0_33, %c0_34] : memref<8x1xf32, #tpu.memory_space<vmem>>, vector<8x1xf32>
      %c0_35 = arith.constant 0 : index
      %c0_36 = arith.constant 0 : index
      %61 = vector.load %arg7[%c0_35, %c0_36] : memref<8x1xf32, #tpu.memory_space<vmem>>, vector<8x1xf32>
      %62 = math.log %61 : vector<8x1xf32>
      %63 = arith.addf %60, %62 : vector<8x1xf32>
      %64 = vector.shape_cast %63 : vector<8x1xf32> to vector<1x8x1xf32>
      %cst_37 = arith.constant dense<0.000000e+00> : vector<1xf32>
      %65 = vector.multi_reduction <add>, %64, %cst_37 [1, 2] : vector<1x8x1xf32> to vector<1xf32>
      %66 = vector.shape_cast %65 : vector<1xf32> to vector<1x1x1xf32>
      %67 = vector.extract %66[0, 0, 0] : f32 from vector<1x1x1xf32>
      %c0_38 = arith.constant 0 : index
      %68 = arith.index_cast %arg0 : i32 to index
      %69 = memref.load %arg5[%c0_38, %68] : memref<3x1xf32, #tpu.memory_space<smem>>
      memref.store %67, %arg5[%c0_38, %68] : memref<3x1xf32, #tpu.memory_space<smem>>
    } else {
    }
    %c0_i32_31 = arith.constant 0 : i32
    %57 = arith.cmpi eq, %arg0, %c0_i32_31 : i32
    %58 = arith.extui %57 : i1 to i32
    %c0_i32_32 = arith.constant 0 : i32
    %59 = arith.cmpi ne, %58, %c0_i32_32 : i32
    scf.if %59 {
      %60 = arith.index_cast %arg1 : i32 to index
      %c0_33 = arith.constant 0 : index
      %c0_34 = arith.constant 0 : index
      %61 = vector.load %arg8[%60, %c0_33, %c0_34] : memref<1x1x8xf32, #tpu.memory_space<vmem>>, vector<1x1x8xf32>
      %62 = vector.shape_cast %61 : vector<1x1x8xf32> to vector<1x8xf32>
      %63 = arith.index_cast %arg1 : i32 to index
      %c0_35 = arith.constant 0 : index
      %c0_36 = arith.constant 0 : index
      %64 = vector.load %arg9[%63, %c0_35, %c0_36] : memref<1x1x8xf32, #tpu.memory_space<vmem>>, vector<1x1x8xf32>
      %65 = vector.shape_cast %64 : vector<1x1x8xf32> to vector<1x8xf32>
      %66 = math.log %65 : vector<1x8xf32>
      %67 = arith.addf %62, %66 : vector<1x8xf32>
      %68 = vector.shape_cast %67 : vector<1x8xf32> to vector<1x1x8xf32>
      %cst_37 = arith.constant dense<0.000000e+00> : vector<1xf32>
      %69 = vector.multi_reduction <add>, %68, %cst_37 [1, 2] : vector<1x1x8xf32> to vector<1xf32>
      %70 = vector.shape_cast %69 : vector<1xf32> to vector<1x1x1xf32>
      %71 = vector.extract %70[0, 0, 0] : f32 from vector<1x1x1xf32>
      %c1 = arith.constant 1 : index
      %72 = arith.index_cast %arg1 : i32 to index
      %73 = memref.load %arg5[%c1, %72] : memref<3x1xf32, #tpu.memory_space<smem>>
      memref.store %71, %arg5[%c1, %72] : memref<3x1xf32, #tpu.memory_space<smem>>
    } else {
    }
    return
  }
  func.func @transform_0(%arg0: i32, %arg1: i32, %arg2: memref<1xi32, #tpu.memory_space<smem>>) -> (i32, i32) {
    %c0_i32 = arith.constant 0 : i32
    %c0_i32_0 = arith.constant 0 : i32
    return %arg0, %c0_i32 : i32, i32
  }
  func.func @transform_1(%arg0: i32, %arg1: i32, %arg2: memref<1xi32, #tpu.memory_space<smem>>) -> (i32, i32) {
    %c0_i32 = arith.constant 0 : i32
    %c0_i32_0 = arith.constant 0 : i32
    return %arg1, %c0_i32 : i32, i32
  }
  func.func @transform_2(%arg0: i32, %arg1: i32, %arg2: memref<1xi32, #tpu.memory_space<smem>>) -> (i32, i32) {
    %c0_i32 = arith.constant 0 : i32
    %c0_i32_0 = arith.constant 0 : i32
    %c0_i32_1 = arith.constant 0 : i32
    return %c0_i32, %c0_i32_0 : i32, i32
  }
}

</mosaic_0001>

<llo_original>
// kernel: tpu_custom_call.1
$region0: #{tpu_custom_call.1}
  #allocation0 [shape = 'u32[]', space=smem, size = 0x4, offset = 0x4, fixed_abs, tag = 'smem constant byte address 0x4 - core index']
  #allocation1 [shape = 'u32[72,128]{1,0:T(1,128)}', space=vmem, size = 0x9000, scoped, tag = 'internal scratch']
  #allocation2 [shape = 'f32[8,1]{1,0:T(8,128)}', space=vmem, size = 0x1000, scoped, tag = 'scratch operand']
  #allocation3 [shape = 'f32[8,1]{1,0:T(8,128)}', space=vmem, size = 0x1000, scoped, tag = 'scratch operand']
  #allocation4 [shape = 'f32[1,1,8]{2,1,0:T(1,128)}', space=vmem, size = 0x200, scoped, tag = 'scratch operand']
  #allocation5 [shape = 'f32[1,1,8]{2,1,0:T(1,128)}', space=vmem, size = 0x200, scoped, tag = 'scratch operand']
  #allocation6 [shape = 's32[1]{0}', space=sflag, size = 0x4, scoped, tag = 'scoped memory for tpu_custom_call.1']
  #allocation7 [shape = 's32[1]{0:T(128)S(6)}', space=smem, size = 0x200, scoped, tag = 'prefetched SMEM operand 0']
  %s0 = inlined_call_operand.<no memory space> [shape: s32[1], index: 0, kind: input, shape index: {}]
  %s1 = inlined_call_operand.hbm [shape: f32[8,32], index: 1, kind: input, shape index: {}]
  %s2 = inlined_call_operand.hbm [shape: f32[8,32], index: 2, kind: input, shape index: {}]
  %s3 = inlined_call_operand.vmem [shape: f32[3,1], index: 3, kind: output, shape index: {}]
  %s4 = sld [smem:[#allocation0]]
  $region46: #{tpu_custom_call.1} parent=0
    _
  %s6 = ssub.s32 1, %s4
  %s7 = scalar_select 0, %s6, %s4
  %8 = sst [smem:[#allocation7]] %s0
  $region1: #{tpu_custom_call.1} parent=0
    #allocation8 [shape = 'u8[4096]{0}', space=vmem, size = 0x1000, scoped, tag = 'input window, operand 1, single buffered']
    #allocation9 [shape = 's32[1]{0}', space=sflag, size = 0x4, scoped, tag = 'scoped memory for tpu_custom_call.1']
    #allocation10 [shape = 's32[1]{0}', space=sflag, size = 0x4, scoped, tag = 'scoped memory for tpu_custom_call.1']
    #allocation11 [shape = 'u8[4096]{0}', space=vmem, size = 0x1000, scoped, tag = 'input window, operand 2, single buffered']
    #allocation12 [shape = 's32[1]{0}', space=sflag, size = 0x4, scoped, tag = 'scoped memory for tpu_custom_call.1']
    #allocation13 [shape = 'u8[2048]{0}', space=smem, size = 0x800, scoped, tag = 'output window, operand 0, single buffered']
    %9 = vsyncpa [#allocation9], 0
    %10 = vsyncpa [#allocation12], 0
    %11 = vsyncpa [#allocation10], 0
    // Predicated region
    $region2: #{tpu_custom_call.1} parent=1 // pred_check
      _
    $region3: #{tpu_custom_call.1} parent=1 // pred_check_branch
      %13 = sbr.rel (0) target = $region5
    $region4: #{tpu_custom_call.1} parent=1 // pred_region
      %15 = vsyncadd [#allocation9], 0
      %s17 = sshll.u32 %s1, 4
      %s18 = int_to_ptr.hbm [resolvable:$true] %s17
      %s19 = sshll.u32 [#allocation8], 4
      %s20 = int_to_ptr.vmem [resolvable:$true] %s19
      %22 = dma.hbm_to_vmem [thread:$0]  %s18, 128, %s20, [#allocation9]
    $region5: #{tpu_custom_call.1} parent=1 // pred_fallthru
      _
    // Predicated region
    $region6: #{tpu_custom_call.1} parent=1 // pred_check
      _
    $region7: #{tpu_custom_call.1} parent=1 // pred_check_branch
      %24 = sbr.rel (0) target = $region9
    $region8: #{tpu_custom_call.1} parent=1 // pred_region
      %26 = vsyncadd [#allocation12], 0
      %s28 = sshll.u32 %s2, 4
      %s29 = int_to_ptr.hbm [resolvable:$true] %s28
      %s30 = sshll.u32 [#allocation11], 4
      %s31 = int_to_ptr.vmem [resolvable:$true] %s30
      %33 = dma.hbm_to_vmem [thread:$0]  %s29, 128, %s31, [#allocation12]
    $region9: #{tpu_custom_call.1} parent=1 // pred_fallthru
      _
    // Predicated region
    $region10: #{tpu_custom_call.1} parent=1 // pred_check
      _
    $region11: #{tpu_custom_call.1} parent=1 // pred_check_branch
      %35 = sbr.rel (0) target = $region13
    $region12: #{tpu_custom_call.1} parent=1 // pred_region
      %37 = dma.done [#allocation9], 128
    $region13: #{tpu_custom_call.1} parent=1 // pred_fallthru
      _
    // Predicated region
    $region14: #{tpu_custom_call.1} parent=1 // pred_check
      _
    $region15: #{tpu_custom_call.1} parent=1 // pred_check_branch
      %39 = sbr.rel (0) target = $region17
    $region16: #{tpu_custom_call.1} parent=1 // pred_region
      %41 = dma.done [#allocation12], 128
    $region17: #{tpu_custom_call.1} parent=1 // pred_fallthru
      _
    %v42 = vld [vmem:[#allocation8] sm:$0xff]
    %v43 = vld [vmem:[#allocation11] sm:$0xff]
    %vm44 = vcmask 261120
    %v46 = vsel %vm44, %v42, 0
    %v49 = vsel %vm44, %v43, 0
    %51 = vmatpush.xpose.msra.mxu0 0.0
    %52 = vmatpush.xpose.msra.mxu0 0.0
    %53 = vmatpush.xpose.msra.mxu0 0.0
    %54 = vmatpush.xpose.msra.mxu0 0.0
    %55 = vmatpush.xpose.msra.mxu0 0.0
    %56 = vmatpush.xpose.msra.mxu0 0.0
    %57 = vmatpush.xpose.msra.mxu0 0.0
    %58 = vmatpush.xpose.msra.mxu0 0.0
    %59 = vmatpush.xpose.msra.mxu0 0.0
    %60 = vmatpush.xpose.msra.mxu0 0.0
    %61 = vmatpush.xpose.msra.mxu0 0.0
    %62 = vmatpush.xpose.msra.mxu0 0.0
    %63 = vmatpush.xpose.msra.mxu0 0.0
    %64 = vmatpush.xpose.msra.mxu0 0.0
    %65 = vmatpush.xpose.msra.mxu0 0.0
    %66 = vmatpush.xpose.msra.mxu0 %v49
    %67 = vmatmul.f32.gmra.mxu0 %v46
    %v68 = vpop.f32.mrf.mxu0
    %v69 = vadd.f32 0.0, %v68
    %70 = vdwg.mxu0
    %p71 = scmp.eq.s32.totalorder 0, 0
    // Predicated region
    $region18: #{tpu_custom_call.1} parent=1 // pred_check
      %p72 = pneg %p71
    $region19: #{tpu_custom_call.1} parent=1 // pred_check_branch
      %74 = sbr.rel (%p72) target = $region21
    $region20: #{tpu_custom_call.1} parent=1 // pred_region
      %vm75 = vcmask 7168
      %76 = vst.msk [vmem:[#allocation2] sm:$0xff] %vm75, -1e+30
      %77 = vst.msk [vmem:[#allocation3] sm:$0xff] %vm75, 0.0
    $region21: #{tpu_custom_call.1} parent=1 // pred_fallthru
      _
    %v78 = vld [vmem:[#allocation2] sm:$0xff]
    %vm79 = vcmask 64512
    %v80 = vsel %vm79, %v69, -inf
    %81 = vmax.xlane.f32.xlu0 %v80
    %v82 = vpop.xlane.xlu0 %81
    %v83 = vmax.f32 %v78, %v82
    %v84 = vsub.f32 %v78, %v83
    %v85 = vmul.f32 %v84, 1.442695
    %v86 = vpow.pop %v85
    %v87 = vld [vmem:[#allocation3] sm:$0xff]
    %v88 = vmul.f32 %v86, %v87
    %90 = vset.pattern.permute.xlu0 0
    %91 = vperm.xlu0 %90, %v83
    %v92 = vpop.permute.xlu0 %91
    %v94 = vsub.f32 %v69, %v92
    %v95 = vmul.f32 %v94, 1.442695
    %v96 = vpow.pop %v95
    %v97 = vsel %vm79, %v96, 0.0
    %98 = vadd.xlane.f32.xlu0 %v97
    %v99 = vpop.xlane.xlu0 %98
    %v100 = vadd.f32 %v88, %v99
    %vm101 = vcmask 7168
    %102 = vst.msk [vmem:[#allocation3] sm:$0xff] %vm101, %v100
    %103 = vst.msk [vmem:[#allocation2] sm:$0xff] %vm101, %v83
    %p104 = scmp.eq.s32.totalorder 0, 0
    // Predicated region
    $region22: #{tpu_custom_call.1} parent=1 // pred_check
      %p105 = pneg %p104
    $region23: #{tpu_custom_call.1} parent=1 // pred_check_branch
      %107 = sbr.rel (%p105) target = $region25
    $region24: #{tpu_custom_call.1} parent=1 // pred_region
      %vm108 = vcmask 57344
      %109 = vst.msk [vmem:[#allocation4] sm:$0x1] %vm108, -1e+30
      %110 = vst.msk [vmem:[#allocation5] sm:$0x1] %vm108, 0.0
    $region25: #{tpu_custom_call.1} parent=1 // pred_fallthru
      _
    %v111 = vld [vmem:[#allocation4] sm:$0x1]
    %v112 = vrot.slane %v80, 4
    %v113 = vmax.f32 %v80, %v112
    %v114 = vrot.slane %v113, 2
    %v115 = vmax.f32 %v113, %v114
    %v116 = vrot.slane %v115, 1
    %v117 = vmax.f32 %v115, %v116
    %v118 = vmax.f32 %v111, %v117
    %v119 = vsub.f32 %v111, %v118
    %v120 = vmul.f32 %v119, 1.442695
    %v121 = vpow.pop %v120
    %v122 = vld [vmem:[#allocation5] sm:$0x1]
    %v123 = vmul.f32 %v121, %v122
    %v125 = vperm.slane %v118, 0
    %v127 = vsub.f32 %v69, %v125
    %v128 = vmul.f32 %v127, 1.442695
    %v129 = vpow.pop %v128
    %v130 = vsel %vm79, %v129, 0.0
    %v131 = vrot.slane %v130, 4
    %v132 = vadd.f32 %v130, %v131
    %v133 = vrot.slane %v132, 2
    %v134 = vadd.f32 %v132, %v133
    %v135 = vrot.slane %v134, 1
    %v136 = vadd.f32 %v134, %v135
    %v137 = vadd.f32 %v123, %v136
    %vm138 = vcmask 57344
    %139 = vst.msk [vmem:[#allocation5] sm:$0x1] %vm138, %v137
    %140 = vst.msk [vmem:[#allocation4] sm:$0x1] %vm138, %v118
    %p141 = scmp.eq.s32.totalorder 0, 0
    // Predicated region
    $region26: #{tpu_custom_call.1} parent=1 // pred_check
      %p142 = pneg %p141
    $region27: #{tpu_custom_call.1} parent=1 // pred_check_branch
      %144 = sbr.rel (%p142) target = $region29
    $region28: #{tpu_custom_call.1} parent=1 // pred_region
      %v145 = vmul.f32 %v42, %v43
      %v146 = vsel %vm44, %v145, 0.0
      %147 = vadd.xlane.f32.xlu0 %v146
      %v148 = vpop.xlane.xlu0 %147
      %v149 = vsel %vm101, %v148, 0.0
      %150 = vadd.xlane.f32.xlu0 %v149
      %v151 = vpop.xlane.xlu0 %150
      %v152 = vrot.slane %v151, 4
      %v153 = vadd.f32 %v151, %v152
      %v154 = vrot.slane %v153, 2
      %v155 = vadd.f32 %v153, %v154
      %v156 = vrot.slane %v155, 1
      %v157 = vadd.f32 %v155, %v156
      %s158 = vtos %v157
      %s159 = sadd.s32 0, 2
      %s160 = smul.u32 %s159, 128
      %s161 = sadd.s32 %s160, 0
      %s162 = scalar_lea.smem [#allocation13], %s161
      %163 = sst [smem:[%s162]] %s158
    $region29: #{tpu_custom_call.1} parent=1 // pred_fallthru
      _
    // Predicated region
    $region30: #{tpu_custom_call.1} parent=1 // pred_check
      %p164 = pneg %p71
    $region31: #{tpu_custom_call.1} parent=1 // pred_check_branch
      %166 = sbr.rel (%p164) target = $region33
    $region32: #{tpu_custom_call.1} parent=1 // pred_region
      %v167 = vld [vmem:[#allocation2] sm:$0xff]
      %v168 = vld [vmem:[#allocation3] sm:$0xff]
      %v169 = vlog2.pop %v168
      %v170 = vmul.f32 %v169, 0.6931472
      %v171 = vadd.f32 %v167, %v170
      %v172 = vsel %vm101, %v171, 0.0
      %173 = vadd.xlane.f32.xlu0 %v172
      %v174 = vpop.xlane.xlu0 %173
      %v175 = vrot.slane %v174, 4
      %v176 = vadd.f32 %v174, %v175
      %v177 = vrot.slane %v176, 2
      %v178 = vadd.f32 %v176, %v177
      %v179 = vrot.slane %v178, 1
      %v180 = vadd.f32 %v178, %v179
      %s181 = vtos %v180
      %s182 = scalar_lea.smem [#allocation13], 0
      %183 = sst [smem:[%s182]] %s181
    $region33: #{tpu_custom_call.1} parent=1 // pred_fallthru
      _
    // Predicated region
    $region34: #{tpu_custom_call.1} parent=1 // pred_check
      %p184 = pneg %p104
    $region35: #{tpu_custom_call.1} parent=1 // pred_check_branch
      %186 = sbr.rel (%p184) target = $region37
    $region36: #{tpu_custom_call.1} parent=1 // pred_region
      %v187 = vld [vmem:[#allocation4] sm:$0x1]
      %v188 = vld [vmem:[#allocation5] sm:$0x1]
      %v189 = vlog2.pop %v188
      %v190 = vmul.f32 %v189, 0.6931472
      %v191 = vadd.f32 %v187, %v190
      %v192 = vsel %vm138, %v191, 0.0
      %193 = vadd.xlane.f32.xlu0 %v192
      %v194 = vpop.xlane.xlu0 %193
      %v195 = vrot.slane %v194, 4
      %v196 = vadd.f32 %v194, %v195
      %v197 = vrot.slane %v196, 2
      %v198 = vadd.f32 %v196, %v197
      %v199 = vrot.slane %v198, 1
      %v200 = vadd.f32 %v198, %v199
      %s201 = vtos %v200
      %s202 = sadd.s32 0, 1
      %s203 = smul.u32 %s202, 128
      %s204 = sadd.s32 %s203, 0
      %s205 = scalar_lea.smem [#allocation13], %s204
      %206 = sst [smem:[%s205]] %s201
    $region37: #{tpu_custom_call.1} parent=1 // pred_fallthru
      _
    // Predicated region
    $region38: #{tpu_custom_call.1} parent=1 // pred_check
      _
    $region39: #{tpu_custom_call.1} parent=1 // pred_check_branch
      %208 = sbr.rel (0) target = $region41
    $region40: #{tpu_custom_call.1} parent=1 // pred_region
      %210 = vsyncadd [#allocation10], 0
      %s212 = sshll.u32 %s3, 4
      %s213 = int_to_ptr.vmem [resolvable:$true] %s212
      %215 = dma.smem_to_vmem [#allocation13], 64, %s213, [#allocation10]
    $region41: #{tpu_custom_call.1} parent=1 // pred_fallthru
      _
    // Predicated region
    $region42: #{tpu_custom_call.1} parent=1 // pred_check
      _
    $region43: #{tpu_custom_call.1} parent=1 // pred_check_branch
      %217 = sbr.rel (0) target = $region45
    $region44: #{tpu_custom_call.1} parent=1 // pred_region
      %219 = dma.done [#allocation10], 64
    $region45: #{tpu_custom_call.1} parent=1 // pred_fallthru
      _
    %220 = sfence
    %221 = vsyncpa [#allocation9], 1
    %222 = vsyncpa [#allocation12], 1
    %223 = vsyncpa [#allocation10], 1

</llo_original>
